<compile_context>
chip_gen: v7x
topology: tpu7x:2x2x1
jax: 0.10.0
libtpu: 0.0.40
codegen_flags: <defaults>
</compile_context>

<pallas_src>
import jax
import jax.numpy as jnp
from jax.experimental import pallas as pl
from jax.experimental.pallas import tpu as pltpu


def _critic_kernel(x_ref, a_ref,
                   w1x_ref, w1a_ref, b1_ref,
                   w2_ref, b2_ref,
                   w3_ref, b3_ref,
                   wq_ref, bq_ref,
                   q_ref):
    # Layer 1: split matmul replaces concat([x, a / max_action]); the scale is already
    # folded into w1a. bf16 operands -> single-pass MXU, f32 accumulation.
    h = (jnp.dot(x_ref[...], w1x_ref[...], preferred_element_type=jnp.float32)
         + jnp.dot(a_ref[...], w1a_ref[...], preferred_element_type=jnp.float32)
         + b1_ref[...])
    h = jnp.maximum(h, 0.0)                                              # f32 VPU
    # Layers 2 / 3: cast activations to bf16 right before each dot, keep add/ReLU in f32.
    h = jnp.maximum(
        jnp.dot(h.astype(jnp.bfloat16), w2_ref[...],
                preferred_element_type=jnp.float32) + b2_ref[...], 0.0)
    h = jnp.maximum(
        jnp.dot(h.astype(jnp.bfloat16), w3_ref[...],
                preferred_element_type=jnp.float32) + b3_ref[...], 0.0)
    # Final 64 -> 1 layer, produced lane-dense as a (1, TB) row:
    #   q_row = wq_row(1,64) . h(TB,64) contracted over the hidden dim.
    q = jax.lax.dot_general(
        wq_ref[...], h.astype(jnp.bfloat16),
        dimension_numbers=(((1,), (1,)), ((), ())),
        preferred_element_type=jnp.float32) + bq_ref[0]
    q_ref[...] = q.astype(q_ref.dtype)


def critic_forward(x, actions, params, max_action, *, block_b=2048):
    """Pallas wrapper. x: (B, obs_dim), actions: (B, act_dim). Returns (B, 1) f32."""
    B, obs_dim = x.shape
    act_dim = actions.shape[1]
    hidden = params["w2"].shape[0]

    # Fold the action scaling into W1's action rows, split W1, cast matmul weights to bf16
    # (tiny one-off XLA ops outside the kernel). Biases stay f32.
    w1 = params["w1"]
    w1x = w1[:obs_dim].astype(jnp.bfloat16)
    w1a = (w1[obs_dim:] * (1.0 / float(max_action))).astype(jnp.bfloat16)
    w2 = params["w2"].astype(jnp.bfloat16)
    w3 = params["w3"].astype(jnp.bfloat16)
    wq_row = params["wq"].reshape(1, hidden).astype(jnp.bfloat16)
    b1 = params["b1"].astype(jnp.float32)
    b2 = params["b2"].astype(jnp.float32)
    b3 = params["b3"].astype(jnp.float32)
    bq = params["bq"].reshape(1).astype(jnp.float32)          # scalar, lives in SMEM

    # Batch tiling. Lane-dense (1, tb) output means multi-step tiles must be 128-aligned;
    # single-tile (full-extent) cases only need sublane (8) alignment.
    LANE, SUB = 128, 8

    def round_up(v, m):
        return ((v + m - 1) // m) * m

    block_b = round_up(max(int(block_b), LANE), LANE)
    if B <= LANE:
        tb = round_up(B, SUB)                     # single full-extent tile
    else:
        # Guarantee >= 2 grid steps so ("parallel",) shards across both v7x TensorCores.
        tb = min(block_b, round_up(pl.cdiv(B, 2), LANE))
    b_pad = round_up(B, tb)
    grid = (b_pad // tb,)

    # bf16 inputs: halves the x / actions DMA bytes (cast numerics identical to casting
    # inside the kernel).
    x = x.astype(jnp.bfloat16)
    actions = actions.astype(jnp.bfloat16)
    if b_pad != B:
        x = jnp.pad(x, ((0, b_pad - B), (0, 0)))
        actions = jnp.pad(actions, ((0, b_pad - B), (0, 0)))

    def batch_spec(feat):
        return pl.BlockSpec((tb, feat), lambda i: (i, 0))

    def full_spec(rows, cols):
        # Same block index at every grid step -> stays resident in VMEM.
        return pl.BlockSpec((rows, cols), lambda i: (0, 0))

    q_row = pl.pallas_call(
        _critic_kernel,
        out_shape=jax.ShapeDtypeStruct((1, b_pad), jnp.float32),
        grid=grid,
        in_specs=[
            batch_spec(obs_dim),                              # x (bf16)
            batch_spec(act_dim),                              # actions (bf16)
            full_spec(obs_dim, hidden),                       # w1 (observation rows)
            full_spec(act_dim, hidden),                       # w1 (action rows, pre-scaled)
            full_spec(1, hidden),                             # b1 (f32)
            full_spec(hidden, hidden),                        # w2
            full_spec(1, hidden),                             # b2
            full_spec(hidden, hidden),                        # w3
            full_spec(1, hidden),                             # b3
            full_spec(1, hidden),                             # wq as a row vector
            pl.BlockSpec(memory_space=pltpu.MemorySpace.SMEM),  # bq scalar
        ],
        out_specs=pl.BlockSpec((1, tb), lambda i: (0, i)),    # lane-dense q row
        compiler_params=pltpu.CompilerParams(
            dimension_semantics=("parallel",)),
    )(x, actions, w1x, w1a, b1, w2, b2, w3, b3, wq_row, bq)
    return q_row[0, :B].reshape(B, 1)


def init_params(key, input_num, hidden=64):
    """Deterministic synthetic init matching the nn.Linear shapes (stored as (in, out))."""
    ks = jax.random.split(key, 8)

    def lin(kw, kb, fan_in, fan_out):
        bound = 1.0 / float(jnp.sqrt(jnp.float32(fan_in)))
        w = jax.random.uniform(kw, (fan_in, fan_out), jnp.float32, -bound, bound)
        b = jax.random.uniform(kb, (1, fan_out), jnp.float32, -bound, bound)
        return w, b

    w1, b1 = lin(ks[0], ks[1], input_num, hidden)
    w2, b2 = lin(ks[2], ks[3], hidden, hidden)
    w3, b3 = lin(ks[4], ks[5], hidden, hidden)
    wq, bq = lin(ks[6], ks[7], hidden, 1)
    return dict(w1=w1, b1=b1, w2=w2, b2=b2, w3=w3, b3=b3, wq=wq, bq=bq)


def critic_ref(x, actions, params, max_action):
    """Pure-JAX f32 reference (mirrors the PyTorch forward exactly)."""
    h = jnp.concatenate([x, actions / max_action], axis=1)
    h = jax.nn.relu(h @ params["w1"] + params["b1"])
    h = jax.nn.relu(h @ params["w2"] + params["b2"])
    h = jax.nn.relu(h @ params["w3"] + params["b3"])
    return h @ params["wq"] + params["bq"]


if __name__ == "__main__":
    obs_dim, act_dim = 24, 8          # input_num = 32, as implied by the module
    input_num = obs_dim + act_dim
    max_action = 2.0                  # env_params['action_max']

    key = jax.random.PRNGKey(0)
    kp, kd = jax.random.split(key)
    params = init_params(kp, input_num)

    # Three configs: tiny single-tile batch, multi-tile batch with padding (exercises the
    # >=2 parallel steps path), and a mid-size batch with the large default tile.
    for B, block_b in [(8, 2048), (200, 128), (384, 2048)]:
        kx, ka = jax.random.split(jax.random.fold_in(kd, B))
        x = jax.random.normal(kx, (B, obs_dim), jnp.float32)
        actions = jax.random.uniform(ka, (B, act_dim), jnp.float32,
                                     -max_action, max_action)

        q = critic_forward(x, actions, params, max_action, block_b=block_b)
        q = jax.block_until_ready(q)

        q_ref = critic_ref(x, actions, params, max_action)
        assert q.shape == (B, 1), f"bad shape {q.shape} at B={B}"
        # bf16 matmul operands with f32 accumulation: tolerances re-validated for bf16.
        assert jnp.allclose(q, q_ref, atol=2e-2, rtol=2e-2), \
            f"mismatch vs reference at B={B}: max abs diff " \
            f"{float(jnp.max(jnp.abs(q - q_ref)))}"

    print("KERNEL_OK")
</pallas_src>

<mosaic_0001>
module attributes {stable_mosaic.version = 11 : i64} {
  func.func @_critic_kernel(%arg0: i32, %arg1: memref<8x24xbf16, #tpu.memory_space<vmem>>, %arg2: memref<8x8xbf16, #tpu.memory_space<vmem>>, %arg3: memref<24x64xbf16, #tpu.memory_space<vmem>>, %arg4: memref<8x64xbf16, #tpu.memory_space<vmem>>, %arg5: memref<1x64xf32, #tpu.memory_space<vmem>>, %arg6: memref<64x64xbf16, #tpu.memory_space<vmem>>, %arg7: memref<1x64xf32, #tpu.memory_space<vmem>>, %arg8: memref<64x64xbf16, #tpu.memory_space<vmem>>, %arg9: memref<1x64xf32, #tpu.memory_space<vmem>>, %arg10: memref<1x64xbf16, #tpu.memory_space<vmem>>, %arg11: memref<1xf32, #tpu.memory_space<smem>>, %arg12: memref<1x8xf32, #tpu.memory_space<vmem>>) attributes {dimension_semantics = [#tpu.dimension_semantics<parallel>], iteration_bounds = array<i64: 1>, scalar_prefetch = 0 : i64, scratch_operands = 0 : i64, tpu.core_type = #tpu.core_type<tc>, window_params = [{transform_indices = @transform_0, window_bounds = array<i64: 8, 24>}, {transform_indices = @transform_1, window_bounds = array<i64: 8, 8>}, {pipeline_mode = #tpu.pipeline_mode<synchronous>, transform_indices = @transform_2, window_bounds = array<i64: 24, 64>}, {pipeline_mode = #tpu.pipeline_mode<synchronous>, transform_indices = @transform_3, window_bounds = array<i64: 8, 64>}, {pipeline_mode = #tpu.pipeline_mode<synchronous>, transform_indices = @transform_4, window_bounds = array<i64: 1, 64>}, {pipeline_mode = #tpu.pipeline_mode<synchronous>, transform_indices = @transform_5, window_bounds = array<i64: 64, 64>}, {pipeline_mode = #tpu.pipeline_mode<synchronous>, transform_indices = @transform_6, window_bounds = array<i64: 1, 64>}, {pipeline_mode = #tpu.pipeline_mode<synchronous>, transform_indices = @transform_7, window_bounds = array<i64: 64, 64>}, {pipeline_mode = #tpu.pipeline_mode<synchronous>, transform_indices = @transform_8, window_bounds = array<i64: 1, 64>}, {pipeline_mode = #tpu.pipeline_mode<synchronous>, transform_indices = @transform_9, window_bounds = array<i64: 1, 64>}, {transform_indices = @transform_10, window_bounds = array<i64: 1>}, {transform_indices = @transform_11, window_bounds = array<i64: 1, 8>}]} {
    %c0 = arith.constant 0 : index
    %c0_0 = arith.constant 0 : index
    %0 = vector.load %arg1[%c0, %c0_0] : memref<8x24xbf16, #tpu.memory_space<vmem>>, vector<8x24xbf16>
    %c0_1 = arith.constant 0 : index
    %c0_2 = arith.constant 0 : index
    %1 = vector.load %arg3[%c0_1, %c0_2] : memref<24x64xbf16, #tpu.memory_space<vmem>>, vector<24x64xbf16>
    %cst = arith.constant dense<0.000000e+00> : vector<8x64xf32>
    %2 = tpu.matmul %0, %1, %cst {dimension_numbers = #tpu.dot_dimension_numbers<[1], [0], [0], [1], [0, 0, 1, 1], [], []>} : vector<8x24xbf16>, vector<24x64xbf16>, vector<8x64xf32> -> vector<8x64xf32>
    %c0_3 = arith.constant 0 : index
    %c0_4 = arith.constant 0 : index
    %3 = vector.load %arg2[%c0_3, %c0_4] : memref<8x8xbf16, #tpu.memory_space<vmem>>, vector<8x8xbf16>
    %c0_5 = arith.constant 0 : index
    %c0_6 = arith.constant 0 : index
    %4 = vector.load %arg4[%c0_5, %c0_6] : memref<8x64xbf16, #tpu.memory_space<vmem>>, vector<8x64xbf16>
    %cst_7 = arith.constant dense<0.000000e+00> : vector<8x64xf32>
    %5 = tpu.matmul %3, %4, %cst_7 {dimension_numbers = #tpu.dot_dimension_numbers<[1], [0], [0], [1], [0, 0, 1, 1], [], []>} : vector<8x8xbf16>, vector<8x64xbf16>, vector<8x64xf32> -> vector<8x64xf32>
    %6 = arith.addf %2, %5 : vector<8x64xf32>
    %c0_8 = arith.constant 0 : index
    %c0_9 = arith.constant 0 : index
    %7 = vector.load %arg5[%c0_8, %c0_9] : memref<1x64xf32, #tpu.memory_space<vmem>>, vector<1x64xf32>
    %8 = vector.broadcast %7 : vector<1x64xf32> to vector<8x64xf32>
    %9 = arith.addf %6, %8 : vector<8x64xf32>
    %cst_10 = arith.constant 0.000000e+00 : f32
    %10 = vector.broadcast %cst_10 : f32 to vector<8x64xf32>
    %11 = arith.maximumf %9, %10 : vector<8x64xf32>
    %12 = arith.truncf %11 : vector<8x64xf32> to vector<8x64xbf16>
    %c0_11 = arith.constant 0 : index
    %c0_12 = arith.constant 0 : index
    %13 = vector.load %arg6[%c0_11, %c0_12] : memref<64x64xbf16, #tpu.memory_space<vmem>>, vector<64x64xbf16>
    %cst_13 = arith.constant dense<0.000000e+00> : vector<8x64xf32>
    %14 = tpu.matmul %12, %13, %cst_13 {dimension_numbers = #tpu.dot_dimension_numbers<[1], [0], [0], [1], [0, 0, 1, 1], [], []>} : vector<8x64xbf16>, vector<64x64xbf16>, vector<8x64xf32> -> vector<8x64xf32>
    %c0_14 = arith.constant 0 : index
    %c0_15 = arith.constant 0 : index
    %15 = vector.load %arg7[%c0_14, %c0_15] : memref<1x64xf32, #tpu.memory_space<vmem>>, vector<1x64xf32>
    %16 = vector.broadcast %15 : vector<1x64xf32> to vector<8x64xf32>
    %17 = arith.addf %14, %16 : vector<8x64xf32>
    %cst_16 = arith.constant 0.000000e+00 : f32
    %18 = vector.broadcast %cst_16 : f32 to vector<8x64xf32>
    %19 = arith.maximumf %17, %18 : vector<8x64xf32>
    %20 = arith.truncf %19 : vector<8x64xf32> to vector<8x64xbf16>
    %c0_17 = arith.constant 0 : index
    %c0_18 = arith.constant 0 : index
    %21 = vector.load %arg8[%c0_17, %c0_18] : memref<64x64xbf16, #tpu.memory_space<vmem>>, vector<64x64xbf16>
    %cst_19 = arith.constant dense<0.000000e+00> : vector<8x64xf32>
    %22 = tpu.matmul %20, %21, %cst_19 {dimension_numbers = #tpu.dot_dimension_numbers<[1], [0], [0], [1], [0, 0, 1, 1], [], []>} : vector<8x64xbf16>, vector<64x64xbf16>, vector<8x64xf32> -> vector<8x64xf32>
    %c0_20 = arith.constant 0 : index
    %c0_21 = arith.constant 0 : index
    %23 = vector.load %arg9[%c0_20, %c0_21] : memref<1x64xf32, #tpu.memory_space<vmem>>, vector<1x64xf32>
    %24 = vector.broadcast %23 : vector<1x64xf32> to vector<8x64xf32>
    %25 = arith.addf %22, %24 : vector<8x64xf32>
    %cst_22 = arith.constant 0.000000e+00 : f32
    %26 = vector.broadcast %cst_22 : f32 to vector<8x64xf32>
    %27 = arith.maximumf %25, %26 : vector<8x64xf32>
    %c0_23 = arith.constant 0 : index
    %c0_24 = arith.constant 0 : index
    %28 = vector.load %arg10[%c0_23, %c0_24] : memref<1x64xbf16, #tpu.memory_space<vmem>>, vector<1x64xbf16>
    %29 = arith.truncf %27 : vector<8x64xf32> to vector<8x64xbf16>
    %cst_25 = arith.constant dense<0.000000e+00> : vector<1x8xf32>
    %30 = tpu.matmul %28, %29, %cst_25 {dimension_numbers = #tpu.dot_dimension_numbers<[1], [1], [0], [0], [0, 0, 1, 0], [], []>} : vector<1x64xbf16>, vector<8x64xbf16>, vector<1x8xf32> -> vector<1x8xf32>
    %c0_26 = arith.constant 0 : index
    %31 = memref.load %arg11[%c0_26] : memref<1xf32, #tpu.memory_space<smem>>
    %32 = vector.broadcast %31 : f32 to vector<1x8xf32>
    %33 = arith.addf %30, %32 : vector<1x8xf32>
    %c0_27 = arith.constant 0 : index
    %c0_28 = arith.constant 0 : index
    %34 = vector.load %arg12[%c0_27, %c0_28] : memref<1x8xf32, #tpu.memory_space<vmem>>, vector<1x8xf32>
    tpu.vector_store %arg12[%c0_27, %c0_28], %33 {strides = array<i32>} : memref<1x8xf32, #tpu.memory_space<vmem>>, vector<1x8xf32>,
    return
  }
  func.func @transform_0(%arg0: i32) -> (i32, i32) {
    %c0_i32 = arith.constant 0 : i32
    %c0_i32_0 = arith.constant 0 : i32
    return %arg0, %c0_i32 : i32, i32
  }
  func.func @transform_1(%arg0: i32) -> (i32, i32) {
    %c0_i32 = arith.constant 0 : i32
    %c0_i32_0 = arith.constant 0 : i32
    return %arg0, %c0_i32 : i32, i32
  }
  func.func @transform_2(%arg0: i32) -> (i32, i32) {
    %c0_i32 = arith.constant 0 : i32
    %c0_i32_0 = arith.constant 0 : i32
    %c0_i32_1 = arith.constant 0 : i32
    return %c0_i32, %c0_i32_0 : i32, i32
  }
  func.func @transform_3(%arg0: i32) -> (i32, i32) {
    %c0_i32 = arith.constant 0 : i32
    %c0_i32_0 = arith.constant 0 : i32
    %c0_i32_1 = arith.constant 0 : i32
    return %c0_i32, %c0_i32_0 : i32, i32
  }
  func.func @transform_4(%arg0: i32) -> (i32, i32) {
    %c0_i32 = arith.constant 0 : i32
    %c0_i32_0 = arith.constant 0 : i32
    %c0_i32_1 = arith.constant 0 : i32
    return %c0_i32, %c0_i32_0 : i32, i32
  }
  func.func @transform_5(%arg0: i32) -> (i32, i32) {
    %c0_i32 = arith.constant 0 : i32
    %c0_i32_0 = arith.constant 0 : i32
    %c0_i32_1 = arith.constant 0 : i32
    return %c0_i32, %c0_i32_0 : i32, i32
  }
  func.func @transform_6(%arg0: i32) -> (i32, i32) {
    %c0_i32 = arith.constant 0 : i32
    %c0_i32_0 = arith.constant 0 : i32
    %c0_i32_1 = arith.constant 0 : i32
    return %c0_i32, %c0_i32_0 : i32, i32
  }
  func.func @transform_7(%arg0: i32) -> (i32, i32) {
    %c0_i32 = arith.constant 0 : i32
    %c0_i32_0 = arith.constant 0 : i32
    %c0_i32_1 = arith.constant 0 : i32
    return %c0_i32, %c0_i32_0 : i32, i32
  }
  func.func @transform_8(%arg0: i32) -> (i32, i32) {
    %c0_i32 = arith.constant 0 : i32
    %c0_i32_0 = arith.constant 0 : i32
    %c0_i32_1 = arith.constant 0 : i32
    return %c0_i32, %c0_i32_0 : i32, i32
  }
  func.func @transform_9(%arg0: i32) -> (i32, i32) {
    %c0_i32 = arith.constant 0 : i32
    %c0_i32_0 = arith.constant 0 : i32
    %c0_i32_1 = arith.constant 0 : i32
    return %c0_i32, %c0_i32_0 : i32, i32
  }
  func.func @transform_10(%arg0: i32) -> i32 {
    %c0_i32 = arith.constant 0 : i32
    %c0_i32_0 = arith.constant 0 : i32
    return %c0_i32 : i32
  }
  func.func @transform_11(%arg0: i32) -> (i32, i32) {
    %c0_i32 = arith.constant 0 : i32
    %c0_i32_0 = arith.constant 0 : i32
    return %c0_i32, %arg0 : i32, i32
  }
}

</mosaic_0001>

<llo_original>
// kernel: tpu_custom_call.1
$region0: #{tpu_custom_call.1}
  #allocation0 [shape = 'u32[]', space=smem, size = 0x4, offset = 0x4, fixed_abs, tag = 'smem constant byte address 0x4 - core index']
  #allocation1 [shape = 'u32[144,128]{1,0:T(1,128)}', space=vmem, size = 0x12000, scoped, tag = 'internal scratch']
  #allocation2 [shape = 'f32[1]{0:T(128)S(6)}', space=smem, size = 0x200, scoped, tag = 'scoped memory for tpu_custom_call.1']
  %s0 = inlined_call_operand.hbm [shape: bf16[8,24], index: 0, kind: input, shape index: {}]
  %s1 = inlined_call_operand.vmem [shape: bf16[8,8], index: 1, kind: input, shape index: {}]
  %s2 = inlined_call_operand.hbm [shape: bf16[24,64], index: 2, kind: input, shape index: {}]
  %s3 = inlined_call_operand.vmem [shape: bf16[8,64], index: 3, kind: input, shape index: {}]
  %s4 = inlined_call_operand.vmem [shape: f32[1,64], index: 4, kind: input, shape index: {}]
  %s5 = inlined_call_operand.hbm [shape: bf16[64,64], index: 5, kind: input, shape index: {}]
  %s6 = inlined_call_operand.vmem [shape: f32[1,64], index: 6, kind: input, shape index: {}]
  %s7 = inlined_call_operand.hbm [shape: bf16[64,64], index: 7, kind: input, shape index: {}]
  %s8 = inlined_call_operand.vmem [shape: f32[1,64], index: 8, kind: input, shape index: {}]
  %s9 = inlined_call_operand.vmem [shape: bf16[1,64], index: 9, kind: input, shape index: {}]
  %s10 = inlined_call_operand.<no memory space> [shape: f32[1], index: 10, kind: input, shape index: {}]
  %s11 = inlined_call_operand.hbm [shape: f32[1,8], index: 11, kind: output, shape index: {}]
  %s12 = sld [smem:[#allocation0]]
  $region70: #{tpu_custom_call.1} parent=0
    _
  %s14 = ssub.s32 1, %s12
  %s15 = scalar_select 0, %s14, %s12
  %16 = sst [smem:[#allocation2]] %s10
  $region1: #{tpu_custom_call.1} parent=0
    #allocation3 [shape = 'u8[2048]{0}', space=vmem, size = 0x800, scoped, tag = 'input window, operand 0, single buffered']
    #allocation4 [shape = 's32[1]{0}', space=sflag, size = 0x4, scoped, tag = 'scoped memory for tpu_custom_call.1']
    #allocation5 [shape = 's32[1]{0}', space=sflag, size = 0x4, scoped, tag = 'scoped memory for tpu_custom_call.1']
    #allocation6 [shape = 'u8[6144]{0}', space=vmem, size = 0x1800, scoped, tag = 'input window, operand 2, single buffered']
    #allocation7 [shape = 's32[1]{0}', space=sflag, size = 0x4, scoped, tag = 'scoped memory for tpu_custom_call.1']
    #allocation8 [shape = 'u8[16384]{0}', space=vmem, size = 0x4000, scoped, tag = 'input window, operand 5, single buffered']
    #allocation9 [shape = 'u8[16384]{0}', space=vmem, size = 0x4000, scoped, tag = 'input window, operand 7, single buffered']
    #allocation10 [shape = 's32[1]{0}', space=sflag, size = 0x4, scoped, tag = 'scoped memory for tpu_custom_call.1']
    #allocation11 [shape = 'u8[512]{0}', space=vmem, size = 0x400, scoped, tag = 'output window, operand 0, single buffered']
    %17 = vsyncpa [#allocation4], 0
    %18 = vsyncpa [#allocation7], 0
    %19 = vsyncpa [#allocation10], 0
    %20 = vsyncpa [#allocation5], 0
    // Predicated region
    $region2: #{tpu_custom_call.1} parent=1 // pred_check
      _
    $region3: #{tpu_custom_call.1} parent=1 // pred_check_branch
      %22 = sbr.rel (0) target = $region5
    $region4: #{tpu_custom_call.1} parent=1 // pred_region
      %s24 = ssub.s32 64, 64
      %25 = vsyncadd [#allocation4], %s24
      %s27 = sshll.u32 [#allocation3], 4
      %s28 = int_to_ptr.vmem [resolvable:$true] %s27
      %30 = dma.hbm_to_vmem [thread:$0]  %s0, 64, %s28, [#allocation4]
    $region5: #{tpu_custom_call.1} parent=1 // pred_fallthru
      _
    // Predicated region
    $region6: #{tpu_custom_call.1} parent=1 // pred_check
      _
    $region7: #{tpu_custom_call.1} parent=1 // pred_check_branch
      %32 = sbr.rel (0) target = $region9
    $region8: #{tpu_custom_call.1} parent=1 // pred_region
      _
    $region9: #{tpu_custom_call.1} parent=1 // pred_fallthru
      _
    // Predicated region
    $region10: #{tpu_custom_call.1} parent=1 // pred_check
      _
    $region11: #{tpu_custom_call.1} parent=1 // pred_check_branch
      %34 = sbr.rel (0) target = $region13
    $region12: #{tpu_custom_call.1} parent=1 // pred_region
      %s36 = ssub.s32 192, 192
      %37 = vsyncadd [#allocation7], %s36
      %s38 = sshll.u32 [#allocation6], 4
      %s39 = int_to_ptr.vmem [resolvable:$true] %s38
      %44 = dma.hbm_to_vmem [thread:$0]  %s2, 192, %s39, [#allocation7], 64, 64, 4
    $region13: #{tpu_custom_call.1} parent=1 // pred_fallthru
      _
    // Predicated region
    $region14: #{tpu_custom_call.1} parent=1 // pred_check
      _
    $region15: #{tpu_custom_call.1} parent=1 // pred_check_branch
      %46 = sbr.rel (0) target = $region17
    $region16: #{tpu_custom_call.1} parent=1 // pred_region
      _
    $region17: #{tpu_custom_call.1} parent=1 // pred_fallthru
      _
    // Predicated region
    $region18: #{tpu_custom_call.1} parent=1 // pred_check
      _
    $region19: #{tpu_custom_call.1} parent=1 // pred_check_branch
      %48 = sbr.rel (0) target = $region21
    $region20: #{tpu_custom_call.1} parent=1 // pred_region
      _
    $region21: #{tpu_custom_call.1} parent=1 // pred_fallthru
      _
    // Predicated region
    $region22: #{tpu_custom_call.1} parent=1 // pred_check
      _
    $region23: #{tpu_custom_call.1} parent=1 // pred_check_branch
      %50 = sbr.rel (0) target = $region25
    $region24: #{tpu_custom_call.1} parent=1 // pred_region
      %s52 = ssub.s32 512, 512
      %53 = vsyncadd [#allocation7], %s52
      %s54 = sshll.u32 [#allocation8], 4
      %s55 = int_to_ptr.vmem [resolvable:$true] %s54
      %60 = dma.hbm_to_vmem [thread:$0]  %s5, 512, %s55, [#allocation7], 64, 64, 4
    $region25: #{tpu_custom_call.1} parent=1 // pred_fallthru
      _
    // Predicated region
    $region26: #{tpu_custom_call.1} parent=1 // pred_check
      _
    $region27: #{tpu_custom_call.1} parent=1 // pred_check_branch
      %62 = sbr.rel (0) target = $region29
    $region28: #{tpu_custom_call.1} parent=1 // pred_region
      _
    $region29: #{tpu_custom_call.1} parent=1 // pred_fallthru
      _
    // Predicated region
    $region30: #{tpu_custom_call.1} parent=1 // pred_check
      _
    $region31: #{tpu_custom_call.1} parent=1 // pred_check_branch
      %64 = sbr.rel (0) target = $region33
    $region32: #{tpu_custom_call.1} parent=1 // pred_region
      %s66 = ssub.s32 512, 512
      %67 = vsyncadd [#allocation10], %s66
      %s68 = sshll.u32 [#allocation9], 4
      %s69 = int_to_ptr.vmem [resolvable:$true] %s68
      %74 = dma.hbm_to_vmem [thread:$0]  %s7, 512, %s69, [#allocation10], 64, 64, 4
    $region33: #{tpu_custom_call.1} parent=1 // pred_fallthru
      _
    // Predicated region
    $region34: #{tpu_custom_call.1} parent=1 // pred_check
      _
    $region35: #{tpu_custom_call.1} parent=1 // pred_check_branch
      %76 = sbr.rel (0) target = $region37
    $region36: #{tpu_custom_call.1} parent=1 // pred_region
      _
    $region37: #{tpu_custom_call.1} parent=1 // pred_fallthru
      _
    // Predicated region
    $region38: #{tpu_custom_call.1} parent=1 // pred_check
      _
    $region39: #{tpu_custom_call.1} parent=1 // pred_check_branch
      %78 = sbr.rel (0) target = $region41
    $region40: #{tpu_custom_call.1} parent=1 // pred_region
      _
    $region41: #{tpu_custom_call.1} parent=1 // pred_fallthru
      _
    // Predicated region
    $region42: #{tpu_custom_call.1} parent=1 // pred_check
      _
    $region43: #{tpu_custom_call.1} parent=1 // pred_check_branch
      %80 = sbr.rel (0) target = $region45
    $region44: #{tpu_custom_call.1} parent=1 // pred_region
      _
    $region45: #{tpu_custom_call.1} parent=1 // pred_fallthru
      _
    // Predicated region
    $region46: #{tpu_custom_call.1} parent=1 // pred_check
      _
    $region47: #{tpu_custom_call.1} parent=1 // pred_check_branch
      %82 = sbr.rel (0) target = $region49
    $region48: #{tpu_custom_call.1} parent=1 // pred_region
      %83 = dma.done [#allocation4], 64
    $region49: #{tpu_custom_call.1} parent=1 // pred_fallthru
      _
    // Predicated region
    $region50: #{tpu_custom_call.1} parent=1 // pred_check
      _
    $region51: #{tpu_custom_call.1} parent=1 // pred_check_branch
      %85 = sbr.rel (0) target = $region53
    $region52: #{tpu_custom_call.1} parent=1 // pred_region
      %86 = dma.done [#allocation7], 192
    $region53: #{tpu_custom_call.1} parent=1 // pred_fallthru
      _
    // Predicated region
    $region54: #{tpu_custom_call.1} parent=1 // pred_check
      _
    $region55: #{tpu_custom_call.1} parent=1 // pred_check_branch
      %88 = sbr.rel (0) target = $region57
    $region56: #{tpu_custom_call.1} parent=1 // pred_region
      %89 = dma.done [#allocation7], 512
    $region57: #{tpu_custom_call.1} parent=1 // pred_fallthru
      _
    // Predicated region
    $region58: #{tpu_custom_call.1} parent=1 // pred_check
      _
    $region59: #{tpu_custom_call.1} parent=1 // pred_check_branch
      %91 = sbr.rel (0) target = $region61
    $region60: #{tpu_custom_call.1} parent=1 // pred_region
      %92 = dma.done [#allocation10], 512
    $region61: #{tpu_custom_call.1} parent=1 // pred_fallthru
      _
    %v94 = vld [vmem:[#allocation3] sm:$0xf]
    %v95 = vld [vmem:[#allocation6] sm:$0xf]
    %v96 = vld [vmem:[#allocation6 + $0x4] sm:$0xf]
    %v97 = vld [vmem:[#allocation6 + $0x8] sm:$0xf]
    %v98 = vld [vmem:[%s1] sm:$0xf]
    %v99 = vld [vmem:[%s3] sm:$0xf]
    %vm100 = vcmask 64512
    %v102 = vsel %vm100, %v98, 0
    %vm104 = vcmask 1043456
    %v106 = vsel %vm104, %v99, 0
    %108 = vmatprep.subr.bf16.mxu0 0
    %109 = vmatpush1.bf16.msra.mxu0 %v106
    %110 = vmatprep.subr.bf16.mxu0 0
    %111 = vmatpush1.bf16.msra.mxu0 0
    %112 = vmatprep.subr.bf16.mxu0 0
    %113 = vmatpush1.bf16.msra.mxu0 0
    %114 = vmatprep.subr.bf16.mxu0 0
    %115 = vmatpush1.bf16.msra.mxu0 0
    %116 = vmatprep.subr.bf16.mxu0 0
    %117 = vmatpush1.bf16.msra.mxu0 0
    %118 = vmatprep.subr.bf16.mxu0 0
    %119 = vmatpush1.bf16.msra.mxu0 0
    %120 = vmatprep.subr.bf16.mxu0 0
    %121 = vmatpush1.bf16.msra.mxu0 0
    %122 = vmatprep.subr.bf16.mxu0 0
    %123 = vmatpush1.bf16.msra.mxu0 0
    %124 = vmatprep.subr.bf16.mxu0 0
    %125 = vmatpush1.bf16.msra.mxu0 0
    %126 = vmatprep.subr.bf16.mxu0 0
    %127 = vmatpush1.bf16.msra.mxu0 0
    %128 = vmatprep.subr.bf16.mxu0 0
    %129 = vmatpush1.bf16.msra.mxu0 0
    %130 = vmatprep.subr.bf16.mxu0 0
    %131 = vmatpush1.bf16.msra.mxu0 0
    %132 = vmatprep.subr.bf16.mxu0 0
    %133 = vmatpush1.bf16.msra.mxu0 0
    %134 = vmatprep.subr.bf16.mxu0 0
    %135 = vmatpush1.bf16.msra.mxu0 0
    %136 = vmatprep.subr.bf16.mxu0 0
    %137 = vmatpush1.bf16.msra.mxu0 0
    %138 = vmatprep.subr.bf16.mxu0 0
    %139 = vmatpush1.bf16.msra.mxu0 0
    %140 = vmatprep.mubr.bf16.mxu0 0
    %141 = vmatmul.mubr.bf16.gmra.mrb[0].mxu0 %v102
    %v142 = vpop.f32.mrb[0].mxu0
    %v143 = vadd.f32 0.0, %v142
    %v144 = vpop.f32.mrb[0].mxu0
    %v145 = vpop.f32.mrb[0].mxu0
    %v146 = vpop.f32.mrb[0].mxu0
    %147 = vdwg.mxu0
    %v151 = vunpack.c.l.b16 %v95
    %v152 = vunpack.c.l.b16 %v96
    %v153 = vunpack.c.l.b16 %v97
    %v154 = vpack.c.b16 %v152, %v151
    %v155 = vpack.c.b16 %v153, %v153
    %vm157 = vcmask 195584
    %v159 = vsel %vm157, %v94, 0
    %v162 = vsel %vm104, %v155, 0
    %164 = vmatprep.subr.bf16.mxu0 0
    %165 = vmatpush1.bf16.msra.mxu0 %v154
    %166 = vmatprep.subr.bf16.mxu0 0
    %167 = vmatpush1.bf16.msra.mxu0 %v162
    %168 = vmatprep.subr.bf16.mxu0 0
    %169 = vmatpush1.bf16.msra.mxu0 0
    %170 = vmatprep.subr.bf16.mxu0 0
    %171 = vmatpush1.bf16.msra.mxu0 0
    %172 = vmatprep.subr.bf16.mxu0 0
    %173 = vmatpush1.bf16.msra.mxu0 0
    %174 = vmatprep.subr.bf16.mxu0 0
    %175 = vmatpush1.bf16.msra.mxu0 0
    %176 = vmatprep.subr.bf16.mxu0 0
    %177 = vmatpush1.bf16.msra.mxu0 0
    %178 = vmatprep.subr.bf16.mxu0 0
    %179 = vmatpush1.bf16.msra.mxu0 0
    %180 = vmatprep.subr.bf16.mxu0 0
    %181 = vmatpush1.bf16.msra.mxu0 0
    %182 = vmatprep.subr.bf16.mxu0 0
    %183 = vmatpush1.bf16.msra.mxu0 0
    %184 = vmatprep.subr.bf16.mxu0 0
    %185 = vmatpush1.bf16.msra.mxu0 0
    %186 = vmatprep.subr.bf16.mxu0 0
    %187 = vmatpush1.bf16.msra.mxu0 0
    %188 = vmatprep.subr.bf16.mxu0 0
    %189 = vmatpush1.bf16.msra.mxu0 0
    %190 = vmatprep.subr.bf16.mxu0 0
    %191 = vmatpush1.bf16.msra.mxu0 0
    %192 = vmatprep.subr.bf16.mxu0 0
    %193 = vmatpush1.bf16.msra.mxu0 0
    %194 = vmatprep.subr.bf16.mxu0 0
    %195 = vmatpush1.bf16.msra.mxu0 0
    %196 = vmatprep.mubr.bf16.mxu0 0
    %197 = vmatmul.mubr.bf16.gmra.mrb[0].mxu0 %v159
    %v198 = vpop.f32.mrb[0].mxu0
    %v199 = vadd.f32 %v143, %v198
    %v200 = vpop.f32.mrb[0].mxu0
    %v201 = vpop.f32.mrb[0].mxu0
    %v202 = vpop.f32.mrb[0].mxu0
    %203 = vdwg.mxu0
    %v204 = vld [vmem:[%s4] sm:$0x1]
    %v206 = vlaneseq
    %v207 = vshrl.u32 %v206, 7
    %v208 = vsub.s32 0, %v207
    %v209 = vrot.slane %v204, %v208
    %v211 = vadd.f32 %v199, %v209
    %v212 = vmax.f32 %v211, 0.0
    %v213 = vpack.c.bf16 %v212, %v212
    %v214 = vld [vmem:[#allocation8] sm:$0xf]
    %v215 = vld [vmem:[#allocation8 + $0x4] sm:$0xf]
    %v216 = vld [vmem:[#allocation8 + $0x8] sm:$0xf]
    %v217 = vld [vmem:[#allocation8 + $0xc] sm:$0xf]
    %v218 = vld [vmem:[#allocation8 + $0x10] sm:$0xf]
    %v219 = vld [vmem:[#allocation8 + $0x14] sm:$0xf]
    %v220 = vld [vmem:[#allocation8 + $0x18] sm:$0xf]
    %v221 = vld [vmem:[#allocation8 + $0x1c] sm:$0xf]
    %v222 = vld [vmem:[%s6] sm:$0x1]
    %v224 = vlaneseq
    %v225 = vshrl.u32 %v224, 7
    %v226 = vsub.s32 0, %v225
    %v227 = vrot.slane %v222, %v226
    %v237 = vunpack.c.l.b16 %v214
    %v238 = vunpack.c.l.b16 %v215
    %v239 = vunpack.c.l.b16 %v216
    %v240 = vunpack.c.l.b16 %v217
    %v241 = vunpack.c.l.b16 %v218
    %v242 = vunpack.c.l.b16 %v219
    %v243 = vunpack.c.l.b16 %v220
    %v244 = vunpack.c.l.b16 %v221
    %v245 = vpack.c.b16 %v238, %v237
    %v246 = vpack.c.b16 %v240, %v239
    %v247 = vpack.c.b16 %v242, %v241
    %v248 = vpack.c.b16 %v244, %v243
    %vm253 = vcmask 523264
    %v255 = vsel %vm253, %v213, 0
    %257 = vmatprep.subr.bf16.mxu0 0
    %258 = vmatpush1.bf16.msra.mxu0 %v245
    %259 = vmatprep.subr.bf16.mxu0 0
    %260 = vmatpush1.bf16.msra.mxu0 %v246
    %261 = vmatprep.subr.bf16.mxu0 0
    %262 = vmatpush1.bf16.msra.mxu0 %v247
    %263 = vmatprep.subr.bf16.mxu0 0
    %264 = vmatpush1.bf16.msra.mxu0 %v248
    %265 = vmatprep.subr.bf16.mxu0 0
    %266 = vmatpush1.bf16.msra.mxu0 0
    %267 = vmatprep.subr.bf16.mxu0 0
    %268 = vmatpush1.bf16.msra.mxu0 0
    %269 = vmatprep.subr.bf16.mxu0 0
    %270 = vmatpush1.bf16.msra.mxu0 0
    %271 = vmatprep.subr.bf16.mxu0 0
    %272 = vmatpush1.bf16.msra.mxu0 0
    %273 = vmatprep.subr.bf16.mxu0 0
    %274 = vmatpush1.bf16.msra.mxu0 0
    %275 = vmatprep.subr.bf16.mxu0 0
    %276 = vmatpush1.bf16.msra.mxu0 0
    %277 = vmatprep.subr.bf16.mxu0 0
    %278 = vmatpush1.bf16.msra.mxu0 0
    %279 = vmatprep.subr.bf16.mxu0 0
    %280 = vmatpush1.bf16.msra.mxu0 0
    %281 = vmatprep.subr.bf16.mxu0 0
    %282 = vmatpush1.bf16.msra.mxu0 0
    %283 = vmatprep.subr.bf16.mxu0 0
    %284 = vmatpush1.bf16.msra.mxu0 0
    %285 = vmatprep.subr.bf16.mxu0 0
    %286 = vmatpush1.bf16.msra.mxu0 0
    %287 = vmatprep.subr.bf16.mxu0 0
    %288 = vmatpush1.bf16.msra.mxu0 0
    %289 = vmatprep.mubr.bf16.mxu0 0
    %290 = vmatmul.mubr.bf16.gmra.mrb[0].mxu0 %v255
    %v291 = vpop.f32.mrb[0].mxu0
    %v292 = vadd.f32 %v227, %v291
    %v293 = vpop.f32.mrb[0].mxu0
    %v294 = vpop.f32.mrb[0].mxu0
    %v295 = vpop.f32.mrb[0].mxu0
    %296 = vdwg.mxu0
    %v297 = vmax.f32 %v292, 0.0
    %v298 = vpack.c.bf16 %v297, %v297
    %v299 = vld [vmem:[#allocation9] sm:$0xf]
    %v300 = vld [vmem:[#allocation9 + $0x4] sm:$0xf]
    %v301 = vld [vmem:[#allocation9 + $0x8] sm:$0xf]
    %v302 = vld [vmem:[#allocation9 + $0xc] sm:$0xf]
    %v303 = vld [vmem:[#allocation9 + $0x10] sm:$0xf]
    %v304 = vld [vmem:[#allocation9 + $0x14] sm:$0xf]
    %v305 = vld [vmem:[#allocation9 + $0x18] sm:$0xf]
    %v306 = vld [vmem:[#allocation9 + $0x1c] sm:$0xf]
    %v307 = vld [vmem:[%s8] sm:$0x1]
    %v309 = vlaneseq
    %v310 = vshrl.u32 %v309, 7
    %v311 = vsub.s32 0, %v310
    %v312 = vrot.slane %v307, %v311
    %v322 = vunpack.c.l.b16 %v299
    %v323 = vunpack.c.l.b16 %v300
    %v324 = vunpack.c.l.b16 %v301
    %v325 = vunpack.c.l.b16 %v302
    %v326 = vunpack.c.l.b16 %v303
    %v327 = vunpack.c.l.b16 %v304
    %v328 = vunpack.c.l.b16 %v305
    %v329 = vunpack.c.l.b16 %v306
    %v330 = vpack.c.b16 %v323, %v322
    %v331 = vpack.c.b16 %v325, %v324
    %v332 = vpack.c.b16 %v327, %v326
    %v333 = vpack.c.b16 %v329, %v328
    %v339 = vsel %vm253, %v298, 0
    %341 = vmatprep.subr.bf16.mxu0 0
    %342 = vmatpush1.bf16.msra.mxu0 %v330
    %343 = vmatprep.subr.bf16.mxu0 0
    %344 = vmatpush1.bf16.msra.mxu0 %v331
    %345 = vmatprep.subr.bf16.mxu0 0
    %346 = vmatpush1.bf16.msra.mxu0 %v332
    %347 = vmatprep.subr.bf16.mxu0 0
    %348 = vmatpush1.bf16.msra.mxu0 %v333
    %349 = vmatprep.subr.bf16.mxu0 0
    %350 = vmatpush1.bf16.msra.mxu0 0
    %351 = vmatprep.subr.bf16.mxu0 0
    %352 = vmatpush1.bf16.msra.mxu0 0
    %353 = vmatprep.subr.bf16.mxu0 0
    %354 = vmatpush1.bf16.msra.mxu0 0
    %355 = vmatprep.subr.bf16.mxu0 0
    %356 = vmatpush1.bf16.msra.mxu0 0
    %357 = vmatprep.subr.bf16.mxu0 0
    %358 = vmatpush1.bf16.msra.mxu0 0
    %359 = vmatprep.subr.bf16.mxu0 0
    %360 = vmatpush1.bf16.msra.mxu0 0
    %361 = vmatprep.subr.bf16.mxu0 0
    %362 = vmatpush1.bf16.msra.mxu0 0
    %363 = vmatprep.subr.bf16.mxu0 0
    %364 = vmatpush1.bf16.msra.mxu0 0
    %365 = vmatprep.subr.bf16.mxu0 0
    %366 = vmatpush1.bf16.msra.mxu0 0
    %367 = vmatprep.subr.bf16.mxu0 0
    %368 = vmatpush1.bf16.msra.mxu0 0
    %369 = vmatprep.subr.bf16.mxu0 0
    %370 = vmatpush1.bf16.msra.mxu0 0
    %371 = vmatprep.subr.bf16.mxu0 0
    %372 = vmatpush1.bf16.msra.mxu0 0
    %373 = vmatprep.mubr.bf16.mxu0 0
    %374 = vmatmul.mubr.bf16.gmra.mrb[0].mxu0 %v339
    %v375 = vpop.f32.mrb[0].mxu0
    %v376 = vadd.f32 %v312, %v375
    %v377 = vpop.f32.mrb[0].mxu0
    %v378 = vpop.f32.mrb[0].mxu0
    %v379 = vpop.f32.mrb[0].mxu0
    %380 = vdwg.mxu0
    %v381 = vmax.f32 %v376, 0.0
    %v382 = vld [vmem:[%s9] sm:$0x1]
    %v383 = vpack.c.bf16 %v381, %v381
    %s384 = sld [smem:[#allocation2]]
    %v385 = vstv %s384
    %v387 = vsel %vm253, %v382, 0
    %v390 = vsel %vm253, %v383, 0
    %392 = vmatprep.subr.bf16.mxu0 0
    %393 = vmatpush1.bf16.xpose.msra.mxu0 %v390
    %394 = vmatprep.subr.bf16.mxu0 0
    %395 = vmatpush1.bf16.xpose.msra.mxu0 0
    %396 = vmatprep.subr.bf16.mxu0 0
    %397 = vmatpush1.bf16.xpose.msra.mxu0 0
    %398 = vmatprep.subr.bf16.mxu0 0
    %399 = vmatpush1.bf16.xpose.msra.mxu0 0
    %400 = vmatprep.subr.bf16.mxu0 0
    %401 = vmatpush1.bf16.xpose.msra.mxu0 0
    %402 = vmatprep.subr.bf16.mxu0 0
    %403 = vmatpush1.bf16.xpose.msra.mxu0 0
    %404 = vmatprep.subr.bf16.mxu0 0
    %405 = vmatpush1.bf16.xpose.msra.mxu0 0
    %406 = vmatprep.subr.bf16.mxu0 0
    %407 = vmatpush1.bf16.xpose.msra.mxu0 0
    %408 = vmatprep.subr.bf16.mxu0 0
    %409 = vmatpush1.bf16.xpose.msra.mxu0 0
    %410 = vmatprep.subr.bf16.mxu0 0
    %411 = vmatpush1.bf16.xpose.msra.mxu0 0
    %412 = vmatprep.subr.bf16.mxu0 0
    %413 = vmatpush1.bf16.xpose.msra.mxu0 0
    %414 = vmatprep.subr.bf16.mxu0 0
    %415 = vmatpush1.bf16.xpose.msra.mxu0 0
    %416 = vmatprep.subr.bf16.mxu0 0
    %417 = vmatpush1.bf16.xpose.msra.mxu0 0
    %418 = vmatprep.subr.bf16.mxu0 0
    %419 = vmatpush1.bf16.xpose.msra.mxu0 0
    %420 = vmatprep.subr.bf16.mxu0 0
    %421 = vmatpush1.bf16.xpose.msra.mxu0 0
    %422 = vmatprep.subr.bf16.mxu0 0
    %423 = vmatpush1.bf16.xpose.msra.mxu0 0
    %424 = vmatprep.mubr.bf16.mxu0 0
    %425 = vmatmul.mubr.bf16.gmra.mrb[0].mxu0 %v387
    %v426 = vpop.f32.mrb[0].mxu0
    %v427 = vadd.f32 %v385, %v426
    %v428 = vpop.f32.mrb[0].mxu0
    %v429 = vpop.f32.mrb[0].mxu0
    %v430 = vpop.f32.mrb[0].mxu0
    %431 = vdwg.mxu0
    %vm432 = vcmask 57344
    %433 = vst.msk [vmem:[#allocation11] sm:$0x1] %vm432, %v427
    // Predicated region
    $region62: #{tpu_custom_call.1} parent=1 // pred_check
      _
    $region63: #{tpu_custom_call.1} parent=1 // pred_check_branch
      %435 = sbr.rel (0) target = $region65
    $region64: #{tpu_custom_call.1} parent=1 // pred_region
      %s437 = ssub.s32 16, 16
      %438 = vsyncadd [#allocation5], %s437
      %s440 = sshll.u32 [#allocation11], 4
      %s441 = int_to_ptr.vmem [resolvable:$true] %s440
      %443 = dma.vmem_to_hbm [thread:$0]  %s441, 16, %s11, [#allocation5]
    $region65: #{tpu_custom_call.1} parent=1 // pred_fallthru
      _
    // Predicated region
    $region66: #{tpu_custom_call.1} parent=1 // pred_check
      _
    $region67: #{tpu_custom_call.1} parent=1 // pred_check_branch
      %445 = sbr.rel (0) target = $region69
    $region68: #{tpu_custom_call.1} parent=1 // pred_region
      %446 = dma.done [#allocation5], 16
    $region69: #{tpu_custom_call.1} parent=1 // pred_fallthru
      _
    %447 = vsyncpa [#allocation4], 1
    %448 = vsyncpa [#allocation7], 1
    %449 = vsyncpa [#allocation10], 1
    %450 = vsyncpa [#allocation5], 1

</llo_original>
